<compile_context>
chip_gen: v7x
topology: tpu7x:2x2x1
jax: 0.10.0
libtpu: 0.0.40
codegen_flags: <defaults>
</compile_context>

<pallas_src>
import functools

import jax
import jax.numpy as jnp
from jax import lax
from jax.experimental import pallas as pl
from jax.experimental.pallas import tpu as pltpu

# Logical (PyTorch) sizes and padded (TPU) sizes.
IN_F, HID, OUT_F = 5, 36, 1
HID_PAD = 40               # hidden dim padded to a sublane multiple of 8
LANE = 128                 # batch-tile granularity (lane width)
CHUNK_TARGET = 2048        # in-kernel sub-chunk size (lanes)


def _round_up(a, m):
    return ((a + m - 1) // m) * m


def _make_kernel(chunk, n_chunks):
    """Build the fused 3-layer MLP kernel for a given in-kernel chunking."""

    def kernel(x_ref, w1_ref, b1_ref, w2_ref, b2_ref, w3_ref, b3_ref, o_ref):
        # x_ref: [IN_F, bt]      w1: [HID_PAD, IN_F]    b1: [HID_PAD, 1]
        #                        w2: [HID_PAD, HID_PAD] b2: [HID_PAD, 1]
        #                        w3: [OUT_F, HID_PAD]   b3: [OUT_F, 1]
        # o_ref: [OUT_F, bt]
        w1 = w1_ref[...]
        w2 = w2_ref[...]
        w3 = w3_ref[...]
        # Hoist bias broadcasts out of the chunk loop (JAX does not CSE broadcast_in_dim).
        b1 = jnp.broadcast_to(b1_ref[...], (HID_PAD, chunk))
        b2 = jnp.broadcast_to(b2_ref[...], (HID_PAD, chunk))
        b3 = jnp.broadcast_to(b3_ref[...], (OUT_F, chunk))

        def sigmoid(z):
            # One EUP op per element instead of exp + reciprocal.
            return 0.5 * jnp.tanh(0.5 * z) + 0.5

        def body(c, carry):
            off = pl.multiple_of(c * chunk, chunk)
            xc = x_ref[:, pl.ds(off, chunk)]                                   # [IN_F, chunk]
            h = sigmoid(jnp.dot(w1, xc, preferred_element_type=jnp.float32) + b1)
            h = sigmoid(jnp.dot(w2, h, preferred_element_type=jnp.float32) + b2)
            h = sigmoid(jnp.dot(w3, h, preferred_element_type=jnp.float32) + b3)
            o_ref[:, pl.ds(off, chunk)] = h.astype(o_ref.dtype)
            return carry

        lax.fori_loop(0, n_chunks, body, None, unroll=True)

    return kernel


def _pad_params(params):
    """Zero-pad PyTorch-layout params ([out,in] weights, [out] biases) to TPU sizes."""
    w1 = jnp.zeros((HID_PAD, IN_F), jnp.float32).at[:HID, :].set(params["w1"])
    b1 = jnp.zeros((HID_PAD, 1), jnp.float32).at[:HID, 0].set(params["b1"])
    w2 = jnp.zeros((HID_PAD, HID_PAD), jnp.float32).at[:HID, :HID].set(params["w2"])
    b2 = jnp.zeros((HID_PAD, 1), jnp.float32).at[:HID, 0].set(params["b2"])
    w3 = jnp.zeros((OUT_F, HID_PAD), jnp.float32).at[:, :HID].set(params["w3"])
    b3 = params["b3"].reshape(OUT_F, 1).astype(jnp.float32)
    return w1, b1, w2, b2, w3, b3


def _tile_sizes(batch, block_batch):
    """Resolve (batch_tile, in-kernel chunk, n_chunks); all lane-aligned."""
    b_round = _round_up(batch, LANE)
    bt = max(LANE, min(_round_up(block_batch, LANE), b_round))
    # Keep >= 2 grid steps when the batch spans >= 2 lane tiles (v7x has 2 TCs).
    if bt >= b_round and b_round >= 2 * LANE:
        bt = _round_up(b_round // 2, LANE)
    # Largest chunk <= CHUNK_TARGET that divides the tile exactly.
    n128 = bt // LANE
    max_c = max(1, min(n128, CHUNK_TARGET // LANE))
    div = max(d for d in range(1, max_c + 1) if n128 % d == 0)
    chunk = div * LANE
    return bt, chunk, bt // chunk


def policy_net_forward(x, params, *, block_batch=16384, features_first=False):
    """Forward pass.

    x: [B, 5] float32 (PyTorch layout), or [5, B] if features_first=True
       (preferred for big rollout batches: skips the wrapper-side repack).
    params: PyTorch-layout dict (w*: [out, in], b*: [out]).
    Returns [B, 1] float32, matching the torch forward semantics.
    """
    if features_first:
        x_t = x.astype(jnp.float32)                 # [IN_F, B]
        assert x_t.shape[0] == IN_F, x.shape
        batch = x_t.shape[1]
    else:
        assert x.shape[1] == IN_F, x.shape
        batch = x.shape[0]
        x_t = x.astype(jnp.float32).T               # [IN_F, B] (one small extra XLA pass)

    bt, chunk, n_chunks = _tile_sizes(batch, block_batch)
    b_pad = pl.cdiv(batch, bt) * bt
    if b_pad != batch:
        x_t = jnp.pad(x_t, ((0, 0), (0, b_pad - batch)))

    w1, b1, w2, b2, w3, b3 = _pad_params(params)

    weight_elems = w1.size + b1.size + w2.size + b2.size + w3.size + b3.size
    cost = pl.CostEstimate(
        flops=2 * b_pad * (IN_F * HID_PAD + HID_PAD * HID_PAD + HID_PAD * OUT_F),
        transcendentals=b_pad * (2 * HID_PAD + OUT_F),
        bytes_accessed=4 * (b_pad * (IN_F + OUT_F) + weight_elems),
    )

    const = lambda shape: pl.BlockSpec(shape, lambda i: (0, 0))  # VMEM-resident weights

    out_t = pl.pallas_call(
        _make_kernel(chunk, n_chunks),
        out_shape=jax.ShapeDtypeStruct((OUT_F, b_pad), jnp.float32),
        grid=(b_pad // bt,),
        in_specs=[
            pl.BlockSpec((IN_F, bt), lambda i: (0, i)),   # x tile walks the batch axis
            const((HID_PAD, IN_F)),                       # w1
            const((HID_PAD, 1)),                          # b1
            const((HID_PAD, HID_PAD)),                    # w2
            const((HID_PAD, 1)),                          # b2
            const((OUT_F, HID_PAD)),                      # w3
            const((OUT_F, 1)),                            # b3
        ],
        out_specs=pl.BlockSpec((OUT_F, bt), lambda i: (0, i)),   # lane-dense [1, bt] output
        compiler_params=pltpu.CompilerParams(
            dimension_semantics=("parallel",),
        ),
        cost_estimate=cost,
    )(x_t, w1, b1, w2, b2, w3, b3)

    return out_t[:, :batch].T  # [B, 1]


def init_params(key):
    """Deterministic synthetic parameters in PyTorch-native layout ([out, in] / [out])."""
    k1, k2, k3, k4, k5, k6 = jax.random.split(key, 6)
    scale = 0.2
    return {
        "w1": scale * jax.random.normal(k1, (HID, IN_F), jnp.float32),
        "b1": scale * jax.random.normal(k2, (HID,), jnp.float32),
        "w2": scale * jax.random.normal(k3, (HID, HID), jnp.float32),
        "b2": scale * jax.random.normal(k4, (HID,), jnp.float32),
        "w3": scale * jax.random.normal(k5, (OUT_F, HID), jnp.float32),
        "b3": scale * jax.random.normal(k6, (OUT_F,), jnp.float32),
    }


def reference_forward(x, params):
    """Pure-JAX reference (mirrors the PyTorch forward)."""
    h = jax.nn.sigmoid(x @ params["w1"].T + params["b1"])
    h = jax.nn.sigmoid(h @ params["w2"].T + params["b2"])
    h = jax.nn.sigmoid(h @ params["w3"].T + params["b3"])
    return h


if __name__ == "__main__":
    key = jax.random.PRNGKey(0)
    pkey, xkey, xkey2 = jax.random.split(key, 3)
    params = init_params(pkey)

    # Small batch (single tile, single chunk).
    batch = 8
    x = jax.random.normal(xkey, (batch, IN_F), jnp.float32)
    out = jax.block_until_ready(policy_net_forward(x, params))
    ref = reference_forward(x, params)
    assert out.shape == (batch, OUT_F), out.shape
    # tanh-form sigmoid vs jax.nn.sigmoid: identical math, different EUP path.
    assert jnp.allclose(out, ref, atol=1e-4, rtol=1e-4), (out, ref)

    # Larger batch: exercises batch padding, a >=2-step grid and VMEM-resident weights.
    batch2 = 200
    x2 = jax.random.normal(xkey2, (batch2, IN_F), jnp.float32)
    out2 = jax.block_until_ready(policy_net_forward(x2, params))
    ref2 = reference_forward(x2, params)
    assert out2.shape == (batch2, OUT_F), out2.shape
    assert jnp.allclose(out2, ref2, atol=1e-4, rtol=1e-4), (out2, ref2)

    print("KERNEL_OK")
</pallas_src>

<mosaic_0001>
module attributes {stable_mosaic.version = 11 : i64} {
  func.func @kernel(%arg0: i32, %arg1: memref<5x128xf32, #tpu.memory_space<vmem>>, %arg2: memref<40x5xf32, #tpu.memory_space<vmem>>, %arg3: memref<40x1xf32, #tpu.memory_space<vmem>>, %arg4: memref<40x40xf32, #tpu.memory_space<vmem>>, %arg5: memref<40x1xf32, #tpu.memory_space<vmem>>, %arg6: memref<1x40xf32, #tpu.memory_space<vmem>>, %arg7: memref<1x1xf32, #tpu.memory_space<vmem>>, %arg8: memref<1x128xf32, #tpu.memory_space<vmem>>) attributes {dimension_semantics = [#tpu.dimension_semantics<parallel>], iteration_bounds = array<i64: 1>, scalar_prefetch = 0 : i64, scratch_operands = 0 : i64, tpu.core_type = #tpu.core_type<tc>, window_params = [{transform_indices = @transform_0, window_bounds = array<i64: 5, 128>}, {pipeline_mode = #tpu.pipeline_mode<synchronous>, transform_indices = @transform_1, window_bounds = array<i64: 40, 5>}, {pipeline_mode = #tpu.pipeline_mode<synchronous>, transform_indices = @transform_2, window_bounds = array<i64: 40, 1>}, {pipeline_mode = #tpu.pipeline_mode<synchronous>, transform_indices = @transform_3, window_bounds = array<i64: 40, 40>}, {pipeline_mode = #tpu.pipeline_mode<synchronous>, transform_indices = @transform_4, window_bounds = array<i64: 40, 1>}, {pipeline_mode = #tpu.pipeline_mode<synchronous>, transform_indices = @transform_5, window_bounds = array<i64: 1, 40>}, {pipeline_mode = #tpu.pipeline_mode<synchronous>, transform_indices = @transform_6, window_bounds = array<i64: 1, 1>}, {transform_indices = @transform_7, window_bounds = array<i64: 1, 128>}]} {
    %c0 = arith.constant 0 : index
    %c0_0 = arith.constant 0 : index
    %0 = vector.load %arg2[%c0, %c0_0] : memref<40x5xf32, #tpu.memory_space<vmem>>, vector<40x5xf32>
    %c0_1 = arith.constant 0 : index
    %c0_2 = arith.constant 0 : index
    %1 = vector.load %arg4[%c0_1, %c0_2] : memref<40x40xf32, #tpu.memory_space<vmem>>, vector<40x40xf32>
    %c0_3 = arith.constant 0 : index
    %c0_4 = arith.constant 0 : index
    %2 = vector.load %arg6[%c0_3, %c0_4] : memref<1x40xf32, #tpu.memory_space<vmem>>, vector<1x40xf32>
    %c0_5 = arith.constant 0 : index
    %c0_6 = arith.constant 0 : index
    %3 = vector.load %arg3[%c0_5, %c0_6] : memref<40x1xf32, #tpu.memory_space<vmem>>, vector<40x1xf32>
    %4 = vector.shape_cast %3 : vector<40x1xf32> to vector<40x1xf32>
    %5 = vector.broadcast %4 : vector<40x1xf32> to vector<40x128xf32>
    %c0_7 = arith.constant 0 : index
    %c0_8 = arith.constant 0 : index
    %6 = vector.load %arg5[%c0_7, %c0_8] : memref<40x1xf32, #tpu.memory_space<vmem>>, vector<40x1xf32>
    %7 = vector.shape_cast %6 : vector<40x1xf32> to vector<40x1xf32>
    %8 = vector.broadcast %7 : vector<40x1xf32> to vector<40x128xf32>
    %c0_9 = arith.constant 0 : index
    %c0_10 = arith.constant 0 : index
    %9 = vector.load %arg7[%c0_9, %c0_10] : memref<1x1xf32, #tpu.memory_space<vmem>>, vector<1x1xf32>
    %10 = vector.shape_cast %9 : vector<1x1xf32> to vector<1x1xf32>
    %11 = vector.broadcast %10 : vector<1x1xf32> to vector<1x128xf32>
    %c0_i32 = arith.constant 0 : i32
    %c128_i32 = arith.constant 128 : i32
    %12 = arith.muli %c0_i32, %c128_i32 : i32
    %13 = tpu.assume_multiple %12, 128 : i32
    %c0_11 = arith.constant 0 : index
    %14 = arith.index_cast %13 : i32 to index
    %15 = vector.load %arg1[%c0_11, %14] : memref<5x128xf32, #tpu.memory_space<vmem>>, vector<5x128xf32>
    %cst = arith.constant dense<0.000000e+00> : vector<40x128xf32>
    %16 = tpu.matmul %0, %15, %cst {dimension_numbers = #tpu.dot_dimension_numbers<[1], [0], [0], [1], [0, 0, 1, 1], [], []>} : vector<40x5xf32>, vector<5x128xf32>, vector<40x128xf32> -> vector<40x128xf32>
    %17 = arith.addf %16, %5 : vector<40x128xf32>
    %cst_12 = arith.constant 5.000000e-01 : f32
    %18 = vector.broadcast %cst_12 : f32 to vector<40x128xf32>
    %19 = arith.mulf %18, %17 : vector<40x128xf32>
    %20 = math.tanh %19 : vector<40x128xf32>
    %cst_13 = arith.constant 5.000000e-01 : f32
    %21 = vector.broadcast %cst_13 : f32 to vector<40x128xf32>
    %22 = arith.mulf %21, %20 : vector<40x128xf32>
    %cst_14 = arith.constant 5.000000e-01 : f32
    %23 = vector.broadcast %cst_14 : f32 to vector<40x128xf32>
    %24 = arith.addf %22, %23 : vector<40x128xf32>
    %cst_15 = arith.constant dense<0.000000e+00> : vector<40x128xf32>
    %25 = tpu.matmul %1, %24, %cst_15 {dimension_numbers = #tpu.dot_dimension_numbers<[1], [0], [0], [1], [0, 0, 1, 1], [], []>} : vector<40x40xf32>, vector<40x128xf32>, vector<40x128xf32> -> vector<40x128xf32>
    %26 = arith.addf %25, %8 : vector<40x128xf32>
    %cst_16 = arith.constant 5.000000e-01 : f32
    %27 = vector.broadcast %cst_16 : f32 to vector<40x128xf32>
    %28 = arith.mulf %27, %26 : vector<40x128xf32>
    %29 = math.tanh %28 : vector<40x128xf32>
    %cst_17 = arith.constant 5.000000e-01 : f32
    %30 = vector.broadcast %cst_17 : f32 to vector<40x128xf32>
    %31 = arith.mulf %30, %29 : vector<40x128xf32>
    %cst_18 = arith.constant 5.000000e-01 : f32
    %32 = vector.broadcast %cst_18 : f32 to vector<40x128xf32>
    %33 = arith.addf %31, %32 : vector<40x128xf32>
    %cst_19 = arith.constant dense<0.000000e+00> : vector<1x128xf32>
    %34 = tpu.matmul %2, %33, %cst_19 {dimension_numbers = #tpu.dot_dimension_numbers<[1], [0], [0], [1], [0, 0, 1, 1], [], []>} : vector<1x40xf32>, vector<40x128xf32>, vector<1x128xf32> -> vector<1x128xf32>
    %35 = arith.addf %34, %11 : vector<1x128xf32>
    %cst_20 = arith.constant 5.000000e-01 : f32
    %36 = vector.broadcast %cst_20 : f32 to vector<1x128xf32>
    %37 = arith.mulf %36, %35 : vector<1x128xf32>
    %38 = math.tanh %37 : vector<1x128xf32>
    %cst_21 = arith.constant 5.000000e-01 : f32
    %39 = vector.broadcast %cst_21 : f32 to vector<1x128xf32>
    %40 = arith.mulf %39, %38 : vector<1x128xf32>
    %cst_22 = arith.constant 5.000000e-01 : f32
    %41 = vector.broadcast %cst_22 : f32 to vector<1x128xf32>
    %42 = arith.addf %40, %41 : vector<1x128xf32>
    %c0_23 = arith.constant 0 : index
    %43 = arith.index_cast %13 : i32 to index
    %44 = vector.load %arg8[%c0_23, %43] : memref<1x128xf32, #tpu.memory_space<vmem>>, vector<1x128xf32>
    tpu.vector_store %arg8[%c0_23, %43], %42 {strides = array<i32>} : memref<1x128xf32, #tpu.memory_space<vmem>>, vector<1x128xf32>,
    %c1_i32 = arith.constant 1 : i32
    return
  }
  func.func @transform_0(%arg0: i32) -> (i32, i32) {
    %c0_i32 = arith.constant 0 : i32
    %c0_i32_0 = arith.constant 0 : i32
    return %c0_i32, %arg0 : i32, i32
  }
  func.func @transform_1(%arg0: i32) -> (i32, i32) {
    %c0_i32 = arith.constant 0 : i32
    %c0_i32_0 = arith.constant 0 : i32
    %c0_i32_1 = arith.constant 0 : i32
    return %c0_i32, %c0_i32_0 : i32, i32
  }
  func.func @transform_2(%arg0: i32) -> (i32, i32) {
    %c0_i32 = arith.constant 0 : i32
    %c0_i32_0 = arith.constant 0 : i32
    %c0_i32_1 = arith.constant 0 : i32
    return %c0_i32, %c0_i32_0 : i32, i32
  }
  func.func @transform_3(%arg0: i32) -> (i32, i32) {
    %c0_i32 = arith.constant 0 : i32
    %c0_i32_0 = arith.constant 0 : i32
    %c0_i32_1 = arith.constant 0 : i32
    return %c0_i32, %c0_i32_0 : i32, i32
  }
  func.func @transform_4(%arg0: i32) -> (i32, i32) {
    %c0_i32 = arith.constant 0 : i32
    %c0_i32_0 = arith.constant 0 : i32
    %c0_i32_1 = arith.constant 0 : i32
    return %c0_i32, %c0_i32_0 : i32, i32
  }
  func.func @transform_5(%arg0: i32) -> (i32, i32) {
    %c0_i32 = arith.constant 0 : i32
    %c0_i32_0 = arith.constant 0 : i32
    %c0_i32_1 = arith.constant 0 : i32
    return %c0_i32, %c0_i32_0 : i32, i32
  }
  func.func @transform_6(%arg0: i32) -> (i32, i32) {
    %c0_i32 = arith.constant 0 : i32
    %c0_i32_0 = arith.constant 0 : i32
    %c0_i32_1 = arith.constant 0 : i32
    return %c0_i32, %c0_i32_0 : i32, i32
  }
  func.func @transform_7(%arg0: i32) -> (i32, i32) {
    %c0_i32 = arith.constant 0 : i32
    %c0_i32_0 = arith.constant 0 : i32
    return %c0_i32, %arg0 : i32, i32
  }
}

</mosaic_0001>

<llo_original>
// kernel: tpu_custom_call.1
$region0: #{tpu_custom_call.1}
  #allocation0 [shape = 'u32[]', space=smem, size = 0x4, offset = 0x4, fixed_abs, tag = 'smem constant byte address 0x4 - core index']
  #allocation1 [shape = 'u32[144,128]{1,0:T(1,128)}', space=vmem, size = 0x12000, scoped, tag = 'internal scratch']
  #allocation2 [shape = 'f32[1,1]{1,0:T(1,128)S(1)}', space=vmem, size = 0x200, scoped, tag = 'scoped memory for tpu_custom_call.1']
  %s0 = inlined_call_operand.vmem [shape: f32[5,128], index: 0, kind: input, shape index: {}]
  %s1 = inlined_call_operand.vmem [shape: f32[40,5], index: 1, kind: input, shape index: {}]
  %s2 = inlined_call_operand.vmem [shape: f32[40,1], index: 2, kind: input, shape index: {}]
  %s3 = inlined_call_operand.vmem [shape: f32[40,40], index: 3, kind: input, shape index: {}]
  %s4 = inlined_call_operand.vmem [shape: f32[40,1], index: 4, kind: input, shape index: {}]
  %s5 = inlined_call_operand.vmem [shape: f32[1,40], index: 5, kind: input, shape index: {}]
  %s6 = inlined_call_operand.<no memory space> [shape: f32[1,1], index: 6, kind: input, shape index: {}]
  %s7 = inlined_call_operand.hbm [shape: f32[1,128], index: 7, kind: output, shape index: {}]
  %s8 = sld [smem:[#allocation0]]
  $region38: #{tpu_custom_call.1} parent=0
    _
  %s10 = ssub.s32 1, %s8
  %s11 = scalar_select 0, %s10, %s8
  %v12 = vstv %s6
  %13 = vst [vmem:[#allocation2] sm:$0x1] %v12
  $region1: #{tpu_custom_call.1} parent=0
    #allocation3 [shape = 'u8[512]{0}', space=vmem, size = 0x400, scoped, tag = 'output window, operand 0, single buffered']
    #allocation4 [shape = 's32[1]{0}', space=sflag, size = 0x4, scoped, tag = 'scoped memory for tpu_custom_call.1']
    %14 = vsyncpa [#allocation4], 0
    // Predicated region
    $region2: #{tpu_custom_call.1} parent=1 // pred_check
      _
    $region3: #{tpu_custom_call.1} parent=1 // pred_check_branch
      %16 = sbr.rel (0) target = $region5
    $region4: #{tpu_custom_call.1} parent=1 // pred_region
      _
    $region5: #{tpu_custom_call.1} parent=1 // pred_fallthru
      _
    // Predicated region
    $region6: #{tpu_custom_call.1} parent=1 // pred_check
      _
    $region7: #{tpu_custom_call.1} parent=1 // pred_check_branch
      %18 = sbr.rel (0) target = $region9
    $region8: #{tpu_custom_call.1} parent=1 // pred_region
      _
    $region9: #{tpu_custom_call.1} parent=1 // pred_fallthru
      _
    // Predicated region
    $region10: #{tpu_custom_call.1} parent=1 // pred_check
      _
    $region11: #{tpu_custom_call.1} parent=1 // pred_check_branch
      %20 = sbr.rel (0) target = $region13
    $region12: #{tpu_custom_call.1} parent=1 // pred_region
      _
    $region13: #{tpu_custom_call.1} parent=1 // pred_fallthru
      _
    // Predicated region
    $region14: #{tpu_custom_call.1} parent=1 // pred_check
      _
    $region15: #{tpu_custom_call.1} parent=1 // pred_check_branch
      %22 = sbr.rel (0) target = $region17
    $region16: #{tpu_custom_call.1} parent=1 // pred_region
      _
    $region17: #{tpu_custom_call.1} parent=1 // pred_fallthru
      _
    // Predicated region
    $region18: #{tpu_custom_call.1} parent=1 // pred_check
      _
    $region19: #{tpu_custom_call.1} parent=1 // pred_check_branch
      %24 = sbr.rel (0) target = $region21
    $region20: #{tpu_custom_call.1} parent=1 // pred_region
      _
    $region21: #{tpu_custom_call.1} parent=1 // pred_fallthru
      _
    // Predicated region
    $region22: #{tpu_custom_call.1} parent=1 // pred_check
      _
    $region23: #{tpu_custom_call.1} parent=1 // pred_check_branch
      %26 = sbr.rel (0) target = $region25
    $region24: #{tpu_custom_call.1} parent=1 // pred_region
      _
    $region25: #{tpu_custom_call.1} parent=1 // pred_fallthru
      _
    // Predicated region
    $region26: #{tpu_custom_call.1} parent=1 // pred_check
      _
    $region27: #{tpu_custom_call.1} parent=1 // pred_check_branch
      %28 = sbr.rel (0) target = $region29
    $region28: #{tpu_custom_call.1} parent=1 // pred_region
      _
    $region29: #{tpu_custom_call.1} parent=1 // pred_fallthru
      _
    %v29 = vld [vmem:[%s1] sm:$0xff]
    %v30 = vld [vmem:[%s1 + $0x8] sm:$0xff]
    %v31 = vld [vmem:[%s1 + $0x10] sm:$0xff]
    %v32 = vld [vmem:[%s1 + $0x18] sm:$0xff]
    %v33 = vld [vmem:[%s1 + $0x20] sm:$0xff]
    %v34 = vld [vmem:[%s3] sm:$0xff]
    %v35 = vld [vmem:[%s3 + $0x8] sm:$0xff]
    %v36 = vld [vmem:[%s3 + $0x10] sm:$0xff]
    %v37 = vld [vmem:[%s3 + $0x18] sm:$0xff]
    %v38 = vld [vmem:[%s3 + $0x20] sm:$0xff]
    %v39 = vld [vmem:[%s5] sm:$0x1]
    %v40 = vld [vmem:[%s2] sm:$0xff]
    %v41 = vld [vmem:[%s2 + $0x8] sm:$0xff]
    %v42 = vld [vmem:[%s2 + $0x10] sm:$0xff]
    %v43 = vld [vmem:[%s2 + $0x18] sm:$0xff]
    %v44 = vld [vmem:[%s2 + $0x20] sm:$0xff]
    %46 = vset.pattern.permute.xlu0 0
    %47 = vperm.xlu0 %46, %v40
    %v48 = vpop.permute.xlu0 %47
    %51 = vset.pattern.permute.xlu0 0
    %52 = vperm.xlu0 %51, %v41
    %v53 = vpop.permute.xlu0 %52
    %56 = vset.pattern.permute.xlu0 0
    %57 = vperm.xlu0 %56, %v42
    %v58 = vpop.permute.xlu0 %57
    %61 = vset.pattern.permute.xlu0 0
    %62 = vperm.xlu0 %61, %v43
    %v63 = vpop.permute.xlu0 %62
    %66 = vset.pattern.permute.xlu0 0
    %67 = vperm.xlu0 %66, %v44
    %v68 = vpop.permute.xlu0 %67
    %v70 = vld [vmem:[%s4] sm:$0xff]
    %v71 = vld [vmem:[%s4 + $0x8] sm:$0xff]
    %v72 = vld [vmem:[%s4 + $0x10] sm:$0xff]
    %v73 = vld [vmem:[%s4 + $0x18] sm:$0xff]
    %v74 = vld [vmem:[%s4 + $0x20] sm:$0xff]
    %76 = vset.pattern.permute.xlu0 0
    %77 = vperm.xlu0 %76, %v70
    %v78 = vpop.permute.xlu0 %77
    %81 = vset.pattern.permute.xlu0 0
    %82 = vperm.xlu0 %81, %v71
    %v83 = vpop.permute.xlu0 %82
    %86 = vset.pattern.permute.xlu0 0
    %87 = vperm.xlu0 %86, %v72
    %v88 = vpop.permute.xlu0 %87
    %91 = vset.pattern.permute.xlu0 0
    %92 = vperm.xlu0 %91, %v73
    %v93 = vpop.permute.xlu0 %92
    %96 = vset.pattern.permute.xlu0 0
    %97 = vperm.xlu0 %96, %v74
    %v98 = vpop.permute.xlu0 %97
    %v100 = vld [vmem:[#allocation2] sm:$0x1]
    %102 = vset.pattern.permute.xlu0 0
    %103 = vperm.xlu0 %102, %v100
    %v104 = vpop.permute.xlu0 %103
    %v106 = vlaneseq
    %v107 = vshrl.u32 %v106, 7
    %v108 = vsub.s32 0, %v107
    %v109 = vrot.slane %v104, %v108
    %v110 = vld [vmem:[%s0] sm:$0x1f]
    %vm111 = vcmask 39936
    %v113 = vsel %vm111, %v29, 0
    %v116 = vsel %vm111, %v30, 0
    %v119 = vsel %vm111, %v31, 0
    %v122 = vsel %vm111, %v32, 0
    %v125 = vsel %vm111, %v33, 0
    %vm127 = vcmask 1044480
    %v129 = vsel %vm127, %v110, 0
    %131 = vmatprep.subr.mxu0 0.0
    %132 = vmatpush1.msra.mxu0 %v129
    %133 = vmatprep.subr.mxu0 0.0
    %134 = vmatpush1.msra.mxu0 0.0
    %135 = vmatprep.subr.mxu0 0.0
    %136 = vmatpush1.msra.mxu0 0.0
    %137 = vmatprep.subr.mxu0 0.0
    %138 = vmatpush1.msra.mxu0 0.0
    %139 = vmatprep.subr.mxu0 0.0
    %140 = vmatpush1.msra.mxu0 0.0
    %141 = vmatprep.subr.mxu0 0.0
    %142 = vmatpush1.msra.mxu0 0.0
    %143 = vmatprep.subr.mxu0 0.0
    %144 = vmatpush1.msra.mxu0 0.0
    %145 = vmatprep.subr.mxu0 0.0
    %146 = vmatpush1.msra.mxu0 0.0
    %147 = vmatprep.subr.mxu0 0.0
    %148 = vmatpush1.msra.mxu0 0.0
    %149 = vmatprep.subr.mxu0 0.0
    %150 = vmatpush1.msra.mxu0 0.0
    %151 = vmatprep.subr.mxu0 0.0
    %152 = vmatpush1.msra.mxu0 0.0
    %153 = vmatprep.subr.mxu0 0.0
    %154 = vmatpush1.msra.mxu0 0.0
    %155 = vmatprep.subr.mxu0 0.0
    %156 = vmatpush1.msra.mxu0 0.0
    %157 = vmatprep.subr.mxu0 0.0
    %158 = vmatpush1.msra.mxu0 0.0
    %159 = vmatprep.subr.mxu0 0.0
    %160 = vmatpush1.msra.mxu0 0.0
    %161 = vmatprep.subr.mxu0 0.0
    %162 = vmatpush1.msra.mxu0 0.0
    %163 = vmatprep.subr.mxu0 0.0
    %164 = vmatpush1.msra.mxu0 0.0
    %165 = vmatprep.subr.mxu0 0.0
    %166 = vmatpush1.msra.mxu0 0.0
    %167 = vmatprep.subr.mxu0 0.0
    %168 = vmatpush1.msra.mxu0 0.0
    %169 = vmatprep.subr.mxu0 0.0
    %170 = vmatpush1.msra.mxu0 0.0
    %171 = vmatprep.subr.mxu0 0.0
    %172 = vmatpush1.msra.mxu0 0.0
    %173 = vmatprep.subr.mxu0 0.0
    %174 = vmatpush1.msra.mxu0 0.0
    %175 = vmatprep.subr.mxu0 0.0
    %176 = vmatpush1.msra.mxu0 0.0
    %177 = vmatprep.subr.mxu0 0.0
    %178 = vmatpush1.msra.mxu0 0.0
    %179 = vmatprep.subr.mxu0 0.0
    %180 = vmatpush1.msra.mxu0 0.0
    %181 = vmatprep.subr.mxu0 0.0
    %182 = vmatpush1.msra.mxu0 0.0
    %183 = vmatprep.subr.mxu0 0.0
    %184 = vmatpush1.msra.mxu0 0.0
    %185 = vmatprep.subr.mxu0 0.0
    %186 = vmatpush1.msra.mxu0 0.0
    %187 = vmatprep.subr.mxu0 0.0
    %188 = vmatpush1.msra.mxu0 0.0
    %189 = vmatprep.subr.mxu0 0.0
    %190 = vmatpush1.msra.mxu0 0.0
    %191 = vmatprep.subr.mxu0 0.0
    %192 = vmatpush1.msra.mxu0 0.0
    %193 = vmatprep.subr.mxu0 0.0
    %194 = vmatpush1.msra.mxu0 0.0
    %195 = vmatprep.mubr.f32.mxu0 0.0
    %196 = vmatmul.mubr.f32.gmra.mrb[0].mxu0 %v113
    %v197 = vpop.f32.mrb[0].mxu0
    %v198 = vadd.f32 %v48, %v197
    %v199 = vpop.f32.mrb[0].mxu0
    %200 = vmatprep.mubr.f32.mxu0 0.0
    %201 = vmatmul.mubr.f32.gmra.mrb[0].mxu0 %v116
    %v202 = vpop.f32.mrb[0].mxu0
    %v203 = vadd.f32 %v53, %v202
    %v204 = vpop.f32.mrb[0].mxu0
    %205 = vmatprep.mubr.f32.mxu0 0.0
    %206 = vmatmul.mubr.f32.gmra.mrb[0].mxu0 %v119
    %v207 = vpop.f32.mrb[0].mxu0
    %v208 = vadd.f32 %v58, %v207
    %v209 = vpop.f32.mrb[0].mxu0
    %210 = vmatprep.mubr.f32.mxu0 0.0
    %211 = vmatmul.mubr.f32.gmra.mrb[0].mxu0 %v122
    %v212 = vpop.f32.mrb[0].mxu0
    %v213 = vadd.f32 %v63, %v212
    %v214 = vpop.f32.mrb[0].mxu0
    %215 = vmatprep.mubr.f32.mxu0 0.0
    %216 = vmatmul.mubr.f32.gmra.mrb[0].mxu0 %v125
    %v217 = vpop.f32.mrb[0].mxu0
    %v218 = vadd.f32 %v68, %v217
    %v219 = vpop.f32.mrb[0].mxu0
    %220 = vdwg.mxu0
    %v221 = vmul.f32 %v198, 0.5
    %v222 = vmul.f32 %v203, 0.5
    %v223 = vmul.f32 %v208, 0.5
    %v224 = vmul.f32 %v213, 0.5
    %v225 = vmul.f32 %v218, 0.5
    %v226 = vtanh.pop %v221
    %v227 = vtanh.pop %v222
    %v228 = vtanh.pop %v223
    %v229 = vtanh.pop %v224
    %v230 = vtanh.pop %v225
    %v231 = vmul.f32 %v226, 0.5
    %v232 = vmul.f32 %v227, 0.5
    %v233 = vmul.f32 %v228, 0.5
    %v234 = vmul.f32 %v229, 0.5
    %v235 = vmul.f32 %v230, 0.5
    %v236 = vadd.f32 %v231, 0.5
    %v237 = vadd.f32 %v232, 0.5
    %v238 = vadd.f32 %v233, 0.5
    %v239 = vadd.f32 %v234, 0.5
    %v240 = vadd.f32 %v235, 0.5
    %vm241 = vcmask 326656
    %v243 = vsel %vm241, %v34, 0
    %v246 = vsel %vm241, %v35, 0
    %v249 = vsel %vm241, %v36, 0
    %v252 = vsel %vm241, %v37, 0
    %v255 = vsel %vm241, %v38, 0
    %257 = vmatprep.subr.mxu0 0.0
    %258 = vmatpush1.msra.mxu0 %v236
    %259 = vmatprep.subr.mxu0 0.0
    %260 = vmatpush1.msra.mxu0 %v237
    %261 = vmatprep.subr.mxu0 0.0
    %262 = vmatpush1.msra.mxu0 %v238
    %263 = vmatprep.subr.mxu0 0.0
    %264 = vmatpush1.msra.mxu0 %v239
    %265 = vmatprep.subr.mxu0 0.0
    %266 = vmatpush1.msra.mxu0 %v240
    %267 = vmatprep.subr.mxu0 0.0
    %268 = vmatpush1.msra.mxu0 0.0
    %269 = vmatprep.subr.mxu0 0.0
    %270 = vmatpush1.msra.mxu0 0.0
    %271 = vmatprep.subr.mxu0 0.0
    %272 = vmatpush1.msra.mxu0 0.0
    %273 = vmatprep.subr.mxu0 0.0
    %274 = vmatpush1.msra.mxu0 0.0
    %275 = vmatprep.subr.mxu0 0.0
    %276 = vmatpush1.msra.mxu0 0.0
    %277 = vmatprep.subr.mxu0 0.0
    %278 = vmatpush1.msra.mxu0 0.0
    %279 = vmatprep.subr.mxu0 0.0
    %280 = vmatpush1.msra.mxu0 0.0
    %281 = vmatprep.subr.mxu0 0.0
    %282 = vmatpush1.msra.mxu0 0.0
    %283 = vmatprep.subr.mxu0 0.0
    %284 = vmatpush1.msra.mxu0 0.0
    %285 = vmatprep.subr.mxu0 0.0
    %286 = vmatpush1.msra.mxu0 0.0
    %287 = vmatprep.subr.mxu0 0.0
    %288 = vmatpush1.msra.mxu0 0.0
    %289 = vmatprep.subr.mxu0 0.0
    %290 = vmatpush1.msra.mxu0 0.0
    %291 = vmatprep.subr.mxu0 0.0
    %292 = vmatpush1.msra.mxu0 0.0
    %293 = vmatprep.subr.mxu0 0.0
    %294 = vmatpush1.msra.mxu0 0.0
    %295 = vmatprep.subr.mxu0 0.0
    %296 = vmatpush1.msra.mxu0 0.0
    %297 = vmatprep.subr.mxu0 0.0
    %298 = vmatpush1.msra.mxu0 0.0
    %299 = vmatprep.subr.mxu0 0.0
    %300 = vmatpush1.msra.mxu0 0.0
    %301 = vmatprep.subr.mxu0 0.0
    %302 = vmatpush1.msra.mxu0 0.0
    %303 = vmatprep.subr.mxu0 0.0
    %304 = vmatpush1.msra.mxu0 0.0
    %305 = vmatprep.subr.mxu0 0.0
    %306 = vmatpush1.msra.mxu0 0.0
    %307 = vmatprep.subr.mxu0 0.0
    %308 = vmatpush1.msra.mxu0 0.0
    %309 = vmatprep.subr.mxu0 0.0
    %310 = vmatpush1.msra.mxu0 0.0
    %311 = vmatprep.subr.mxu0 0.0
    %312 = vmatpush1.msra.mxu0 0.0
    %313 = vmatprep.subr.mxu0 0.0
    %314 = vmatpush1.msra.mxu0 0.0
    %315 = vmatprep.subr.mxu0 0.0
    %316 = vmatpush1.msra.mxu0 0.0
    %317 = vmatprep.subr.mxu0 0.0
    %318 = vmatpush1.msra.mxu0 0.0
    %319 = vmatprep.subr.mxu0 0.0
    %320 = vmatpush1.msra.mxu0 0.0
    %321 = vmatprep.mubr.f32.mxu0 0.0
    %322 = vmatmul.mubr.f32.gmra.mrb[0].mxu0 %v243
    %v323 = vpop.f32.mrb[0].mxu0
    %v324 = vadd.f32 %v78, %v323
    %v325 = vpop.f32.mrb[0].mxu0
    %326 = vmatprep.mubr.f32.mxu0 0.0
    %327 = vmatmul.mubr.f32.gmra.mrb[0].mxu0 %v246
    %v328 = vpop.f32.mrb[0].mxu0
    %v329 = vadd.f32 %v83, %v328
    %v330 = vpop.f32.mrb[0].mxu0
    %331 = vmatprep.mubr.f32.mxu0 0.0
    %332 = vmatmul.mubr.f32.gmra.mrb[0].mxu0 %v249
    %v333 = vpop.f32.mrb[0].mxu0
    %v334 = vadd.f32 %v88, %v333
    %v335 = vpop.f32.mrb[0].mxu0
    %336 = vmatprep.mubr.f32.mxu0 0.0
    %337 = vmatmul.mubr.f32.gmra.mrb[0].mxu0 %v252
    %v338 = vpop.f32.mrb[0].mxu0
    %v339 = vadd.f32 %v93, %v338
    %v340 = vpop.f32.mrb[0].mxu0
    %341 = vmatprep.mubr.f32.mxu0 0.0
    %342 = vmatmul.mubr.f32.gmra.mrb[0].mxu0 %v255
    %v343 = vpop.f32.mrb[0].mxu0
    %v344 = vadd.f32 %v98, %v343
    %v345 = vpop.f32.mrb[0].mxu0
    %346 = vdwg.mxu0
    %v347 = vmul.f32 %v324, 0.5
    %v348 = vmul.f32 %v329, 0.5
    %v349 = vmul.f32 %v334, 0.5
    %v350 = vmul.f32 %v339, 0.5
    %v351 = vmul.f32 %v344, 0.5
    %v352 = vtanh.pop %v347
    %v353 = vtanh.pop %v348
    %v354 = vtanh.pop %v349
    %v355 = vtanh.pop %v350
    %v356 = vtanh.pop %v351
    %v357 = vmul.f32 %v352, 0.5
    %v358 = vmul.f32 %v353, 0.5
    %v359 = vmul.f32 %v354, 0.5
    %v360 = vmul.f32 %v355, 0.5
    %v361 = vmul.f32 %v356, 0.5
    %v362 = vadd.f32 %v357, 0.5
    %v363 = vadd.f32 %v358, 0.5
    %v364 = vadd.f32 %v359, 0.5
    %v365 = vadd.f32 %v360, 0.5
    %v366 = vadd.f32 %v361, 0.5
    %v368 = vsel %vm241, %v39, 0
    %370 = vmatprep.subr.mxu0 0.0
    %371 = vmatpush1.msra.mxu0 %v362
    %372 = vmatprep.subr.mxu0 0.0
    %373 = vmatpush1.msra.mxu0 %v363
    %374 = vmatprep.subr.mxu0 0.0
    %375 = vmatpush1.msra.mxu0 %v364
    %376 = vmatprep.subr.mxu0 0.0
    %377 = vmatpush1.msra.mxu0 %v365
    %378 = vmatprep.subr.mxu0 0.0
    %379 = vmatpush1.msra.mxu0 %v366
    %380 = vmatprep.subr.mxu0 0.0
    %381 = vmatpush1.msra.mxu0 0.0
    %382 = vmatprep.subr.mxu0 0.0
    %383 = vmatpush1.msra.mxu0 0.0
    %384 = vmatprep.subr.mxu0 0.0
    %385 = vmatpush1.msra.mxu0 0.0
    %386 = vmatprep.subr.mxu0 0.0
    %387 = vmatpush1.msra.mxu0 0.0
    %388 = vmatprep.subr.mxu0 0.0
    %389 = vmatpush1.msra.mxu0 0.0
    %390 = vmatprep.subr.mxu0 0.0
    %391 = vmatpush1.msra.mxu0 0.0
    %392 = vmatprep.subr.mxu0 0.0
    %393 = vmatpush1.msra.mxu0 0.0
    %394 = vmatprep.subr.mxu0 0.0
    %395 = vmatpush1.msra.mxu0 0.0
    %396 = vmatprep.subr.mxu0 0.0
    %397 = vmatpush1.msra.mxu0 0.0
    %398 = vmatprep.subr.mxu0 0.0
    %399 = vmatpush1.msra.mxu0 0.0
    %400 = vmatprep.subr.mxu0 0.0
    %401 = vmatpush1.msra.mxu0 0.0
    %402 = vmatprep.subr.mxu0 0.0
    %403 = vmatpush1.msra.mxu0 0.0
    %404 = vmatprep.subr.mxu0 0.0
    %405 = vmatpush1.msra.mxu0 0.0
    %406 = vmatprep.subr.mxu0 0.0
    %407 = vmatpush1.msra.mxu0 0.0
    %408 = vmatprep.subr.mxu0 0.0
    %409 = vmatpush1.msra.mxu0 0.0
    %410 = vmatprep.subr.mxu0 0.0
    %411 = vmatpush1.msra.mxu0 0.0
    %412 = vmatprep.subr.mxu0 0.0
    %413 = vmatpush1.msra.mxu0 0.0
    %414 = vmatprep.subr.mxu0 0.0
    %415 = vmatpush1.msra.mxu0 0.0
    %416 = vmatprep.subr.mxu0 0.0
    %417 = vmatpush1.msra.mxu0 0.0
    %418 = vmatprep.subr.mxu0 0.0
    %419 = vmatpush1.msra.mxu0 0.0
    %420 = vmatprep.subr.mxu0 0.0
    %421 = vmatpush1.msra.mxu0 0.0
    %422 = vmatprep.subr.mxu0 0.0
    %423 = vmatpush1.msra.mxu0 0.0
    %424 = vmatprep.subr.mxu0 0.0
    %425 = vmatpush1.msra.mxu0 0.0
    %426 = vmatprep.subr.mxu0 0.0
    %427 = vmatpush1.msra.mxu0 0.0
    %428 = vmatprep.subr.mxu0 0.0
    %429 = vmatpush1.msra.mxu0 0.0
    %430 = vmatprep.subr.mxu0 0.0
    %431 = vmatpush1.msra.mxu0 0.0
    %432 = vmatprep.subr.mxu0 0.0
    %433 = vmatpush1.msra.mxu0 0.0
    %434 = vmatprep.mubr.f32.mxu0 0.0
    %435 = vmatmul.mubr.f32.gmra.mrb[0].mxu0 %v368
    %v436 = vpop.f32.mrb[0].mxu0
    %v437 = vadd.f32 %v109, %v436
    %v438 = vpop.f32.mrb[0].mxu0
    %439 = vdwg.mxu0
    %v440 = vmul.f32 %v437, 0.5
    %v441 = vtanh.pop %v440
    %v442 = vmul.f32 %v441, 0.5
    %v443 = vadd.f32 %v442, 0.5
    %444 = vst [vmem:[#allocation3] sm:$0x1] %v443
    // Predicated region
    $region30: #{tpu_custom_call.1} parent=1 // pred_check
      _
    $region31: #{tpu_custom_call.1} parent=1 // pred_check_branch
      %446 = sbr.rel (0) target = $region33
    $region32: #{tpu_custom_call.1} parent=1 // pred_region
      %s448 = ssub.s32 16, 16
      %449 = vsyncadd [#allocation4], %s448
      %s451 = sshll.u32 [#allocation3], 4
      %s452 = int_to_ptr.vmem [resolvable:$true] %s451
      %454 = dma.vmem_to_hbm [thread:$0]  %s452, 16, %s7, [#allocation4]
    $region33: #{tpu_custom_call.1} parent=1 // pred_fallthru
      _
    // Predicated region
    $region34: #{tpu_custom_call.1} parent=1 // pred_check
      _
    $region35: #{tpu_custom_call.1} parent=1 // pred_check_branch
      %456 = sbr.rel (0) target = $region37
    $region36: #{tpu_custom_call.1} parent=1 // pred_region
      %457 = dma.done [#allocation4], 16
    $region37: #{tpu_custom_call.1} parent=1 // pred_fallthru
      _
    %458 = vsyncpa [#allocation4], 1

</llo_original>
